<compile_context>
chip_gen: v6e
topology: v6e:2x2x1
jax: 0.10.0
libtpu: 0.0.40
codegen_flags: <defaults>
</compile_context>

<pallas_src>
from math import sqrt

import numpy as np
import jax
import jax.numpy as jnp
from jax import lax
from jax.experimental import pallas as pl
from jax.experimental.pallas import tpu as pltpu


# ---------------------------------------------------------------------------
# Config (small, consistent with the module's constructor)
# ---------------------------------------------------------------------------
BATCH = 2
SEQ = 8
DIM = 32
HEADS = 2
DIM_HEAD = 16
NUM_MEM_KV = 4
MP_ADD_T = 0.3
HIDDEN = HEADS * DIM_HEAD          # 32
SCALE = DIM_HEAD ** (-0.5)
PIX_EPS = 1e-4                     # PixelNorm eps
W_EPS = 1e-4                       # Linear weight-norm eps

BN = BATCH * SEQ                   # 16 tokens
N_ROW = HEADS * BN                 # 32 stacked (head, batch, token) query rows
N_COL = HEADS * NUM_MEM_KV + HEADS * BN   # 8 mem cols + 32 seq cols = 40
MEM_ROW = DIM                      # param-buffer row offset of the mem K/V slab
BIAS_ROW = MEM_ROW + HEADS * NUM_MEM_KV   # 40: row offset of the score-bias slab
PR = BIAS_ROW + N_ROW              # 72 param-buffer rows (multiple of 8)
PC = 128                           # lane-dense param-buffer width


def _l2norm(t, axis=-1, eps=1e-12):
    # F.normalize semantics: t / max(||t||_2, eps)
    n = jnp.sqrt(jnp.sum(t * t, axis=axis, keepdims=True))
    return t / jnp.maximum(n, eps)


def _pixel_norm(t, eps=PIX_EPS):
    # PixelNorm: l2norm over last dim * sqrt(dim)
    return _l2norm(t, axis=-1, eps=eps) * jnp.sqrt(jnp.float32(t.shape[-1]))


def _build_score_bias():
    """(N_ROW, N_COL) additive bias: 0 where (row, col) share (head, batch), -1e30 elsewhere.

    Rows:  (head, batch, token)   with row = h*BATCH*SEQ + b*SEQ + n.
    Cols:  [0, H*M)            -> mem keys, head-major (col // NUM_MEM_KV == head)
           [H*M, H*M + H*B*S)  -> seq keys, ordered (head, batch, token).
    """
    bias = np.full((N_ROW, N_COL), -1e30, dtype=np.float32)
    for h in range(HEADS):
        for b in range(BATCH):
            r0 = h * BATCH * SEQ + b * SEQ
            bias[r0:r0 + SEQ, h * NUM_MEM_KV:(h + 1) * NUM_MEM_KV] = 0.0
            c0 = HEADS * NUM_MEM_KV + h * BATCH * SEQ + b * SEQ
            bias[r0:r0 + SEQ, c0:c0 + SEQ] = 0.0
    return bias


# ---------------------------------------------------------------------------
# Pallas kernel: single step, all batches and heads fused
# ---------------------------------------------------------------------------
def mp_attention_kernel(x_ref, p_ref, o_ref):
    # x_ref: (BN, DIM) flattened tokens.
    # p_ref: (PR, 128) packed params:
    #   [0:DIM,      0:96 ]  wqkv (pre-normalized, pre-transposed)
    #   [0:HIDDEN,  96:128]  wout (pre-normalized, pre-transposed)
    #   [32:40,      0:16 ]  mem K, head-major (raw; pixel-norm happens in-kernel)
    #   [32:40,     16:32 ]  mem V, head-major
    #   [40:72,      0:40 ]  score-bias mask (0 / -1e30)
    x2 = x_ref[...]                                                   # (16, 32)

    wqkv = p_ref[0:DIM, 0:3 * HIDDEN]                                 # (32, 96)
    wout = p_ref[0:HIDDEN, 3 * HIDDEN:3 * HIDDEN + DIM]               # (32, 32)
    mem_k = p_ref[MEM_ROW:MEM_ROW + HEADS * NUM_MEM_KV, 0:DIM_HEAD]   # (8, 16)
    mem_v = p_ref[MEM_ROW:MEM_ROW + HEADS * NUM_MEM_KV,
                  DIM_HEAD:2 * DIM_HEAD]                              # (8, 16)
    bias = p_ref[BIAS_ROW:BIAS_ROW + N_ROW, 0:N_COL]                  # (32, 40)

    # --- QKV projection for all tokens at once (one MXU matmul) ---
    qkv = jnp.dot(x2, wqkv, preferred_element_type=jnp.float32)       # (16, 96)

    # --- head-major stacks: rows ordered (head, batch, token) ---
    q_stack = jnp.concatenate(
        [qkv[:, 0:DIM_HEAD], qkv[:, DIM_HEAD:HIDDEN]], axis=0)                      # (32, 16)
    k_stack = jnp.concatenate(
        [mem_k,
         qkv[:, HIDDEN:HIDDEN + DIM_HEAD],
         qkv[:, HIDDEN + DIM_HEAD:2 * HIDDEN]], axis=0)                             # (40, 16)
    v_stack = jnp.concatenate(
        [mem_v,
         qkv[:, 2 * HIDDEN:2 * HIDDEN + DIM_HEAD],
         qkv[:, 2 * HIDDEN + DIM_HEAD:3 * HIDDEN]], axis=0)                         # (40, 16)

    # --- pixel norm (F.normalize * sqrt(D)); attention scale folded into q gain ---
    eps2 = jnp.float32(PIX_EPS * PIX_EPS)

    def _pnorm(t, gain):
        ss = jnp.sum(t * t, axis=-1, keepdims=True)
        return t * (lax.rsqrt(jnp.maximum(ss, eps2)) * jnp.float32(gain))

    q_n = _pnorm(q_stack, sqrt(DIM_HEAD) * SCALE)                     # (32, 16)
    k_n = _pnorm(k_stack, sqrt(DIM_HEAD))                             # (40, 16)
    v_n = _pnorm(v_stack, sqrt(DIM_HEAD))                             # (40, 16)

    # --- one scores matmul for every (batch, head) pair; mask invalid blocks ---
    sim = lax.dot_general(q_n, k_n, (((1,), (1,)), ((), ())),
                          preferred_element_type=jnp.float32)         # (32, 40)
    sim = sim + bias                                                  # invalid -> ~-1e30

    m = jnp.max(sim, axis=-1, keepdims=True)                          # (32, 1), max of valid cols
    p = jnp.exp(sim - m)                                              # invalid -> exactly 0
    denom = jnp.sum(p, axis=-1, keepdims=True)                        # (32, 1)
    # approx=True would be a single EUP vrcp but misses the 1e-5 check; keep the exact path.
    inv = pl.reciprocal(denom, approx=False)

    out_stack = jnp.dot(p, v_n, preferred_element_type=jnp.float32) * inv           # (32, 16)

    # --- heads back onto lanes -> one output-projection matmul ---
    out_cat = jnp.concatenate([out_stack[0:BN, :], out_stack[BN:2 * BN, :]], axis=1)  # (16, 32)
    proj = jnp.dot(out_cat, wout, preferred_element_type=jnp.float32)                 # (16, 32)

    # --- MPAdd residual: (out*(1-t) + res*t) / sqrt((1-t)^2 + t^2); single full store ---
    t = MP_ADD_T
    inv_mp = jnp.float32(1.0 / sqrt((1.0 - t) ** 2 + t ** 2))
    o_ref[...] = (proj * jnp.float32(1.0 - t) + x2 * jnp.float32(t)) * inv_mp


# ---------------------------------------------------------------------------
# Wrapper
# ---------------------------------------------------------------------------
def mp_attention(x, w_qkv, w_out, mem_kv):
    """x: (B, N, DIM) f32.  w_qkv: (3*HIDDEN, DIM).  w_out: (DIM, HIDDEN).
    mem_kv: (2, HEADS, NUM_MEM_KV, DIM_HEAD)."""
    b, n, dim = x.shape
    bn = b * n
    assert (b, n, dim) == (BATCH, SEQ, DIM)

    # Batch-invariant glue hoisted out of the kernel:
    # Linear "forced weight normalization": l2norm rows (eps clamp) / sqrt(fan_in), pre-T.
    wqkv_n = (_l2norm(w_qkv, axis=-1, eps=W_EPS) / sqrt(dim)).T          # (DIM, 3*HIDDEN)
    wout_n = (_l2norm(w_out, axis=-1, eps=W_EPS) / sqrt(HIDDEN)).T       # (HIDDEN, DIM)
    mem_k = mem_kv[0].reshape(HEADS * NUM_MEM_KV, DIM_HEAD)              # raw; normed in-kernel
    mem_v = mem_kv[1].reshape(HEADS * NUM_MEM_KV, DIM_HEAD)

    # One lane-dense packed parameter buffer (one DMA instead of four + a constant).
    params = jnp.zeros((PR, PC), jnp.float32)
    params = params.at[0:dim, 0:3 * HIDDEN].set(wqkv_n.astype(jnp.float32))
    params = params.at[0:HIDDEN, 3 * HIDDEN:3 * HIDDEN + dim].set(wout_n.astype(jnp.float32))
    params = params.at[MEM_ROW:MEM_ROW + HEADS * NUM_MEM_KV, 0:DIM_HEAD].set(
        mem_k.astype(jnp.float32))
    params = params.at[MEM_ROW:MEM_ROW + HEADS * NUM_MEM_KV, DIM_HEAD:2 * DIM_HEAD].set(
        mem_v.astype(jnp.float32))
    params = params.at[BIAS_ROW:BIAS_ROW + N_ROW, 0:N_COL].set(jnp.asarray(_build_score_bias()))

    x2 = x.reshape(bn, dim).astype(jnp.float32)

    out = pl.pallas_call(
        mp_attention_kernel,
        out_shape=jax.ShapeDtypeStruct((bn, dim), jnp.float32),
        grid_spec=pltpu.PrefetchScalarGridSpec(
            num_scalar_prefetch=0,
            grid=(1,),
            in_specs=[
                pl.BlockSpec((bn, dim), lambda i: (0, 0)),   # x (flattened tokens)
                pl.BlockSpec((PR, PC), lambda i: (0, 0)),    # packed params + bias mask
            ],
            out_specs=pl.BlockSpec((bn, dim), lambda i: (0, 0)),
        ),
        compiler_params=pltpu.CompilerParams(dimension_semantics=("arbitrary",)),
    )(x2, params)
    return out.reshape(b, n, dim)


# ---------------------------------------------------------------------------
# Pure-JAX reference (mirrors the PyTorch forward exactly; eval mode, dropout=0)
# ---------------------------------------------------------------------------
def mp_attention_ref(x, w_qkv, w_out, mem_kv):
    b, n, dim = x.shape
    wqkv = _l2norm(w_qkv, axis=-1, eps=W_EPS) / sqrt(dim)
    wout = _l2norm(w_out, axis=-1, eps=W_EPS) / sqrt(HIDDEN)

    qkv = x @ wqkv.T                                   # (b, n, 3*HIDDEN)
    q, k, v = jnp.split(qkv, 3, axis=-1)
    reshape_heads = lambda t: t.reshape(b, n, HEADS, DIM_HEAD).transpose(0, 2, 1, 3)
    q, k, v = map(reshape_heads, (q, k, v))            # (b, h, n, d)

    mk = jnp.broadcast_to(mem_kv[0][None], (b, HEADS, NUM_MEM_KV, DIM_HEAD))
    mv = jnp.broadcast_to(mem_kv[1][None], (b, HEADS, NUM_MEM_KV, DIM_HEAD))
    k = jnp.concatenate([mk, k], axis=-2)
    v = jnp.concatenate([mv, v], axis=-2)

    q, k, v = map(_pixel_norm, (q, k, v))
    q = q * SCALE
    sim = jnp.einsum('bhid,bhjd->bhij', q, k)
    attn = jax.nn.softmax(sim, axis=-1)
    out = jnp.einsum('bhij,bhjd->bhid', attn, v)
    out = out.transpose(0, 2, 1, 3).reshape(b, n, HIDDEN)
    out = out @ wout.T

    t = MP_ADD_T
    return (out * (1.0 - t) + x * t) / sqrt((1.0 - t) ** 2 + t ** 2)


# ---------------------------------------------------------------------------
if __name__ == "__main__":
    key = jax.random.PRNGKey(0)
    kx, kw1, kw2, kmem = jax.random.split(key, 4)

    x = jax.random.normal(kx, (BATCH, SEQ, DIM), dtype=jnp.float32)
    w_qkv = jax.random.normal(kw1, (3 * HIDDEN, DIM), dtype=jnp.float32)   # to_qkv.weight
    w_out = jax.random.normal(kw2, (DIM, HIDDEN), dtype=jnp.float32)       # to_out.weight
    mem_kv = jax.random.normal(kmem, (2, HEADS, NUM_MEM_KV, DIM_HEAD), dtype=jnp.float32)

    out = mp_attention(x, w_qkv, w_out, mem_kv)
    out = jax.block_until_ready(out)

    ref = mp_attention_ref(x, w_qkv, w_out, mem_kv)
    np.testing.assert_allclose(np.asarray(out), np.asarray(ref), rtol=1e-5, atol=1e-5)

    print("KERNEL_OK")
</pallas_src>

<mosaic_0001>
module attributes {stable_mosaic.version = 11 : i64} {
  func.func @mp_attention_kernel(%arg0: i32, %arg1: memref<16x32xf32, #tpu.memory_space<vmem>>, %arg2: memref<72x128xf32, #tpu.memory_space<vmem>>, %arg3: memref<16x32xf32, #tpu.memory_space<vmem>>) attributes {dimension_semantics = [#tpu.dimension_semantics<arbitrary>], iteration_bounds = array<i64: 1>, scalar_prefetch = 0 : i64, scratch_operands = 0 : i64, tpu.core_type = #tpu.core_type<tc>, window_params = [{pipeline_mode = #tpu.pipeline_mode<synchronous>, transform_indices = @transform_0, window_bounds = array<i64: 16, 32>}, {pipeline_mode = #tpu.pipeline_mode<synchronous>, transform_indices = @transform_1, window_bounds = array<i64: 72, 128>}, {pipeline_mode = #tpu.pipeline_mode<synchronous>, transform_indices = @transform_2, window_bounds = array<i64: 16, 32>}]} {
    %c0 = arith.constant 0 : index
    %c0_0 = arith.constant 0 : index
    %0 = vector.load %arg1[%c0, %c0_0] : memref<16x32xf32, #tpu.memory_space<vmem>>, vector<16x32xf32>
    %c0_1 = arith.constant 0 : index
    %c0_2 = arith.constant 0 : index
    %1 = vector.load %arg2[%c0_1, %c0_2] : memref<72x128xf32, #tpu.memory_space<vmem>>, vector<32x96xf32>
    %c0_3 = arith.constant 0 : index
    %c96 = arith.constant 96 : index
    %2 = vector.load %arg2[%c0_3, %c96] : memref<72x128xf32, #tpu.memory_space<vmem>>, vector<32x32xf32>
    %c32 = arith.constant 32 : index
    %c0_4 = arith.constant 0 : index
    %3 = vector.load %arg2[%c32, %c0_4] : memref<72x128xf32, #tpu.memory_space<vmem>>, vector<8x16xf32>
    %c32_5 = arith.constant 32 : index
    %c16 = arith.constant 16 : index
    %4 = vector.load %arg2[%c32_5, %c16] : memref<72x128xf32, #tpu.memory_space<vmem>>, vector<8x16xf32>
    %c40 = arith.constant 40 : index
    %c0_6 = arith.constant 0 : index
    %5 = vector.load %arg2[%c40, %c0_6] : memref<72x128xf32, #tpu.memory_space<vmem>>, vector<32x40xf32>
    %cst = arith.constant dense<0.000000e+00> : vector<16x96xf32>
    %6 = tpu.matmul %0, %1, %cst {dimension_numbers = #tpu.dot_dimension_numbers<[1], [0], [0], [1], [0, 0, 1, 1], [], []>} : vector<16x32xf32>, vector<32x96xf32>, vector<16x96xf32> -> vector<16x96xf32>
    %7 = vector.extract_strided_slice %6 {offsets = [0, 0], sizes = [16, 16], strides = [1, 1]} : vector<16x96xf32> to vector<16x16xf32>
    %8 = vector.extract_strided_slice %6 {offsets = [0, 16], sizes = [16, 16], strides = [1, 1]} : vector<16x96xf32> to vector<16x16xf32>
    %9 = tpu.concatenate %7, %8 in 0 : vector<16x16xf32>, vector<16x16xf32> -> vector<32x16xf32>
    %10 = vector.extract_strided_slice %6 {offsets = [0, 32], sizes = [16, 16], strides = [1, 1]} : vector<16x96xf32> to vector<16x16xf32>
    %11 = vector.extract_strided_slice %6 {offsets = [0, 48], sizes = [16, 16], strides = [1, 1]} : vector<16x96xf32> to vector<16x16xf32>
    %12 = tpu.concatenate %3, %10, %11 in 0 : vector<8x16xf32>, vector<16x16xf32>, vector<16x16xf32> -> vector<40x16xf32>
    %13 = vector.extract_strided_slice %6 {offsets = [0, 64], sizes = [16, 16], strides = [1, 1]} : vector<16x96xf32> to vector<16x16xf32>
    %14 = vector.extract_strided_slice %6 {offsets = [0, 80], sizes = [16, 16], strides = [1, 1]} : vector<16x96xf32> to vector<16x16xf32>
    %15 = tpu.concatenate %4, %13, %14 in 0 : vector<8x16xf32>, vector<16x16xf32>, vector<16x16xf32> -> vector<40x16xf32>
    %16 = arith.mulf %9, %9 : vector<32x16xf32>
    %cst_7 = arith.constant dense<0.000000e+00> : vector<32xf32>
    %17 = vector.multi_reduction <add>, %16, %cst_7 [1] : vector<32x16xf32> to vector<32xf32>
    %18 = vector.shape_cast %17 : vector<32xf32> to vector<32x1xf32>
    %cst_8 = arith.constant 9.99999993E-9 : f32
    %19 = vector.broadcast %cst_8 : f32 to vector<32x1xf32>
    %20 = arith.maximumf %18, %19 : vector<32x1xf32>
    %21 = math.rsqrt %20 : vector<32x1xf32>
    %cst_9 = arith.constant 1.000000e+00 : f32
    %22 = vector.broadcast %cst_9 : f32 to vector<32x1xf32>
    %23 = arith.mulf %21, %22 : vector<32x1xf32>
    %24 = vector.broadcast %23 : vector<32x1xf32> to vector<32x16xf32>
    %25 = arith.mulf %9, %24 : vector<32x16xf32>
    %26 = arith.mulf %12, %12 : vector<40x16xf32>
    %cst_10 = arith.constant dense<0.000000e+00> : vector<40xf32>
    %27 = vector.multi_reduction <add>, %26, %cst_10 [1] : vector<40x16xf32> to vector<40xf32>
    %28 = vector.shape_cast %27 : vector<40xf32> to vector<40x1xf32>
    %cst_11 = arith.constant 9.99999993E-9 : f32
    %29 = vector.broadcast %cst_11 : f32 to vector<40x1xf32>
    %30 = arith.maximumf %28, %29 : vector<40x1xf32>
    %31 = math.rsqrt %30 : vector<40x1xf32>
    %cst_12 = arith.constant 4.000000e+00 : f32
    %32 = vector.broadcast %cst_12 : f32 to vector<40x1xf32>
    %33 = arith.mulf %31, %32 : vector<40x1xf32>
    %34 = vector.broadcast %33 : vector<40x1xf32> to vector<40x16xf32>
    %35 = arith.mulf %12, %34 : vector<40x16xf32>
    %36 = arith.mulf %15, %15 : vector<40x16xf32>
    %cst_13 = arith.constant dense<0.000000e+00> : vector<40xf32>
    %37 = vector.multi_reduction <add>, %36, %cst_13 [1] : vector<40x16xf32> to vector<40xf32>
    %38 = vector.shape_cast %37 : vector<40xf32> to vector<40x1xf32>
    %cst_14 = arith.constant 9.99999993E-9 : f32
    %39 = vector.broadcast %cst_14 : f32 to vector<40x1xf32>
    %40 = arith.maximumf %38, %39 : vector<40x1xf32>
    %41 = math.rsqrt %40 : vector<40x1xf32>
    %cst_15 = arith.constant 4.000000e+00 : f32
    %42 = vector.broadcast %cst_15 : f32 to vector<40x1xf32>
    %43 = arith.mulf %41, %42 : vector<40x1xf32>
    %44 = vector.broadcast %43 : vector<40x1xf32> to vector<40x16xf32>
    %45 = arith.mulf %15, %44 : vector<40x16xf32>
    %cst_16 = arith.constant dense<0.000000e+00> : vector<32x40xf32>
    %46 = tpu.matmul %25, %35, %cst_16 {dimension_numbers = #tpu.dot_dimension_numbers<[1], [1], [0], [0], [0, 0, 1, 0], [], []>} : vector<32x16xf32>, vector<40x16xf32>, vector<32x40xf32> -> vector<32x40xf32>
    %47 = arith.addf %46, %5 : vector<32x40xf32>
    %cst_17 = arith.constant dense<0xFF800000> : vector<32xf32>
    %48 = vector.multi_reduction <maximumf>, %47, %cst_17 [1] : vector<32x40xf32> to vector<32xf32>
    %49 = vector.shape_cast %48 : vector<32xf32> to vector<32x1xf32>
    %50 = vector.broadcast %49 : vector<32x1xf32> to vector<32x40xf32>
    %51 = arith.subf %47, %50 : vector<32x40xf32>
    %52 = math.exp %51 : vector<32x40xf32>
    %cst_18 = arith.constant dense<0.000000e+00> : vector<32xf32>
    %53 = vector.multi_reduction <add>, %52, %cst_18 [1] : vector<32x40xf32> to vector<32xf32>
    %54 = vector.shape_cast %53 : vector<32xf32> to vector<32x1xf32>
    %55 = tpu.reciprocal %54 : vector<32x1xf32> -> vector<32x1xf32>
    %cst_19 = arith.constant dense<0.000000e+00> : vector<32x16xf32>
    %56 = tpu.matmul %52, %45, %cst_19 {dimension_numbers = #tpu.dot_dimension_numbers<[1], [0], [0], [1], [0, 0, 1, 1], [], []>} : vector<32x40xf32>, vector<40x16xf32>, vector<32x16xf32> -> vector<32x16xf32>
    %57 = vector.broadcast %55 : vector<32x1xf32> to vector<32x16xf32>
    %58 = arith.mulf %56, %57 : vector<32x16xf32>
    %59 = vector.extract_strided_slice %58 {offsets = [0, 0], sizes = [16, 16], strides = [1, 1]} : vector<32x16xf32> to vector<16x16xf32>
    %60 = vector.extract_strided_slice %58 {offsets = [16, 0], sizes = [16, 16], strides = [1, 1]} : vector<32x16xf32> to vector<16x16xf32>
    %61 = tpu.concatenate %59, %60 in 1 : vector<16x16xf32>, vector<16x16xf32> -> vector<16x32xf32>
    %cst_20 = arith.constant dense<0.000000e+00> : vector<16x32xf32>
    %62 = tpu.matmul %61, %2, %cst_20 {dimension_numbers = #tpu.dot_dimension_numbers<[1], [0], [0], [1], [0, 0, 1, 1], [], []>} : vector<16x32xf32>, vector<32x32xf32>, vector<16x32xf32> -> vector<16x32xf32>
    %cst_21 = arith.constant 0.699999988 : f32
    %63 = vector.broadcast %cst_21 : f32 to vector<16x32xf32>
    %64 = arith.mulf %62, %63 : vector<16x32xf32>
    %cst_22 = arith.constant 3.000000e-01 : f32
    %65 = vector.broadcast %cst_22 : f32 to vector<16x32xf32>
    %66 = arith.mulf %0, %65 : vector<16x32xf32>
    %67 = arith.addf %64, %66 : vector<16x32xf32>
    %cst_23 = arith.constant 1.31306434 : f32
    %68 = vector.broadcast %cst_23 : f32 to vector<16x32xf32>
    %69 = arith.mulf %67, %68 : vector<16x32xf32>
    %c0_24 = arith.constant 0 : index
    %c0_25 = arith.constant 0 : index
    %70 = vector.load %arg3[%c0_24, %c0_25] : memref<16x32xf32, #tpu.memory_space<vmem>>, vector<16x32xf32>
    tpu.vector_store %arg3[%c0_24, %c0_25], %69 {strides = array<i32>} : memref<16x32xf32, #tpu.memory_space<vmem>>, vector<16x32xf32>,
    return
  }
  func.func @transform_0(%arg0: i32) -> (i32, i32) {
    %c0_i32 = arith.constant 0 : i32
    %c0_i32_0 = arith.constant 0 : i32
    %c0_i32_1 = arith.constant 0 : i32
    return %c0_i32, %c0_i32_0 : i32, i32
  }
  func.func @transform_1(%arg0: i32) -> (i32, i32) {
    %c0_i32 = arith.constant 0 : i32
    %c0_i32_0 = arith.constant 0 : i32
    %c0_i32_1 = arith.constant 0 : i32
    return %c0_i32, %c0_i32_0 : i32, i32
  }
  func.func @transform_2(%arg0: i32) -> (i32, i32) {
    %c0_i32 = arith.constant 0 : i32
    %c0_i32_0 = arith.constant 0 : i32
    %c0_i32_1 = arith.constant 0 : i32
    return %c0_i32, %c0_i32_0 : i32, i32
  }
}

</mosaic_0001>

<llo_original>
// kernel: tpu_custom_call.1
$region0: #{tpu_custom_call.1}
  #allocation0 [shape = 'u32[]', space=smem, size = 0x4, offset = 0x4, fixed_abs, tag = 'smem constant byte address 0x4 - core index']
  #allocation1 [shape = 'u32[144,128]{1,0:T(1,128)}', space=vmem, size = 0x12000, scoped, tag = 'internal scratch']
  %s0 = inlined_call_operand.hbm [shape: f32[16,32], index: 0, kind: input, shape index: {}]
  %s1 = inlined_call_operand.hbm [shape: f32[72,128], index: 1, kind: input, shape index: {}]
  %s2 = inlined_call_operand.hbm [shape: f32[16,32], index: 2, kind: output, shape index: {}]
  %s3 = sld [smem:[#allocation0]]
  $region26: #{tpu_custom_call.1} parent=0
    _
  %s5 = ssub.s32 1, %s3
  %s6 = scalar_select 0, %s5, %s3
  $region1: #{tpu_custom_call.1} parent=0
    #allocation2 [shape = 'u8[8192]{0}', space=vmem, size = 0x2000, scoped, tag = 'input window, operand 0, single buffered']
    #allocation3 [shape = 's32[1]{0}', space=sflag, size = 0x4, scoped, tag = 'scoped memory for tpu_custom_call.1']
    #allocation4 [shape = 's32[1]{0}', space=sflag, size = 0x4, scoped, tag = 'scoped memory for tpu_custom_call.1']
    #allocation5 [shape = 'u8[36864]{0}', space=vmem, size = 0x9000, scoped, tag = 'input window, operand 1, single buffered']
    #allocation6 [shape = 's32[1]{0}', space=sflag, size = 0x4, scoped, tag = 'scoped memory for tpu_custom_call.1']
    #allocation7 [shape = 'u8[8192]{0}', space=vmem, size = 0x2000, scoped, tag = 'output window, operand 0, single buffered']
    %7 = vsyncpa [#allocation3], 0
    %8 = vsyncpa [#allocation6], 0
    %9 = vsyncpa [#allocation4], 0
    // Predicated region
    $region2: #{tpu_custom_call.1} parent=1 // pred_check
      _
    $region3: #{tpu_custom_call.1} parent=1 // pred_check_branch
      %11 = sbr.rel (0) target = $region5
    $region4: #{tpu_custom_call.1} parent=1 // pred_region
      %s13 = ssub.s32 256, 256
      %14 = vsyncadd [#allocation3], %s13
      %s15 = sshll.u32 [#allocation2], 4
      %s16 = int_to_ptr.vmem [resolvable:$true] %s15
      %21 = dma.hbm_to_vmem [thread:$0]  %s0, 256, %s16, [#allocation3], 128, 128, 8
    $region5: #{tpu_custom_call.1} parent=1 // pred_fallthru
      _
    // Predicated region
    $region6: #{tpu_custom_call.1} parent=1 // pred_check
      _
    $region7: #{tpu_custom_call.1} parent=1 // pred_check_branch
      %23 = sbr.rel (0) target = $region9
    $region8: #{tpu_custom_call.1} parent=1 // pred_region
      %s25 = ssub.s32 1152, 1152
      %26 = vsyncadd [#allocation6], %s25
      %s27 = sshll.u32 [#allocation5], 4
      %s28 = int_to_ptr.vmem [resolvable:$true] %s27
      %33 = dma.hbm_to_vmem [thread:$0]  %s1, 1152, %s28, [#allocation6], 128, 128, 8
    $region9: #{tpu_custom_call.1} parent=1 // pred_fallthru
      _
    // Predicated region
    $region10: #{tpu_custom_call.1} parent=1 // pred_check
      _
    $region11: #{tpu_custom_call.1} parent=1 // pred_check_branch
      %35 = sbr.rel (0) target = $region13
    $region12: #{tpu_custom_call.1} parent=1 // pred_region
      %36 = dma.done [#allocation3], 256
    $region13: #{tpu_custom_call.1} parent=1 // pred_fallthru
      _
    // Predicated region
    $region14: #{tpu_custom_call.1} parent=1 // pred_check
      _
    $region15: #{tpu_custom_call.1} parent=1 // pred_check_branch
      %38 = sbr.rel (0) target = $region17
    $region16: #{tpu_custom_call.1} parent=1 // pred_region
      %39 = dma.done [#allocation6], 1152
    $region17: #{tpu_custom_call.1} parent=1 // pred_fallthru
      _
    %v40 = vld [vmem:[#allocation2] sm:$0xff]
    %v41 = vld [vmem:[#allocation2 + $0x8] sm:$0xff]
    %v42 = vld [vmem:[#allocation5] sm:$0xff]
    %v43 = vld [vmem:[#allocation5 + $0x8] sm:$0xff]
    %v44 = vld [vmem:[#allocation5 + $0x10] sm:$0xff]
    %v45 = vld [vmem:[#allocation5 + $0x18] sm:$0xff]
    %v46 = vld [vmem:[#allocation5 + $0x20] sm:$0xff]
    %v47 = vld [vmem:[#allocation5 + $0x28] sm:$0xff]
    %v48 = vld [vmem:[#allocation5 + $0x30] sm:$0xff]
    %v49 = vld [vmem:[#allocation5 + $0x38] sm:$0xff]
    %v50 = vld [vmem:[#allocation5 + $0x40] sm:$0xff]
    %vm51 = vcmask 261120
    %v53 = vsel %vm51, %v40, 0
    %v56 = vsel %vm51, %v41, 0
    %58 = vmatprep.subr.mxu0 0.0
    %59 = vmatpush1.msra.mxu0 0.0
    %60 = vmatprep.subr.mxu0 0.0
    %61 = vmatpush1.msra.mxu0 0.0
    %62 = vmatprep.subr.mxu0 0.0
    %63 = vmatpush1.msra.mxu0 0.0
    %64 = vmatprep.subr.mxu0 0.0
    %65 = vmatpush1.msra.mxu0 0.0
    %66 = vmatprep.subr.mxu0 0.0
    %67 = vmatpush1.msra.mxu0 0.0
    %68 = vmatprep.subr.mxu0 0.0
    %69 = vmatpush1.msra.mxu0 0.0
    %70 = vmatprep.subr.mxu0 0.0
    %71 = vmatpush1.msra.mxu0 0.0
    %72 = vmatprep.subr.mxu0 0.0
    %73 = vmatpush1.msra.mxu0 0.0
    %74 = vmatprep.subr.mxu0 0.0
    %75 = vmatpush1.msra.mxu0 0.0
    %76 = vmatprep.subr.mxu0 0.0
    %77 = vmatpush1.msra.mxu0 0.0
    %78 = vmatprep.subr.mxu0 0.0
    %79 = vmatpush1.msra.mxu0 0.0
    %80 = vmatprep.subr.mxu0 0.0
    %81 = vmatpush1.msra.mxu0 0.0
    %82 = vmatprep.subr.mxu0 0.0
    %83 = vmatpush1.msra.mxu0 %v45
    %84 = vmatprep.subr.mxu0 0.0
    %85 = vmatpush1.msra.mxu0 %v44
    %86 = vmatprep.subr.mxu0 0.0
    %87 = vmatpush1.msra.mxu0 %v43
    %88 = vmatprep.subr.mxu0 0.0
    %89 = vmatpush1.msra.mxu0 %v42
    %90 = vmatprep.subr.mxu0 0.0
    %91 = vmatpush2.msra.mxu0 0.0
    %92 = vmatprep.subr.mxu0 0.0
    %93 = vmatpush2.msra.mxu0 0.0
    %94 = vmatprep.subr.mxu0 0.0
    %95 = vmatpush2.msra.mxu0 0.0
    %96 = vmatprep.subr.mxu0 0.0
    %97 = vmatpush2.msra.mxu0 0.0
    %98 = vmatprep.subr.mxu0 0.0
    %99 = vmatpush2.msra.mxu0 0.0
    %100 = vmatprep.subr.mxu0 0.0
    %101 = vmatpush2.msra.mxu0 0.0
    %102 = vmatprep.subr.mxu0 0.0
    %103 = vmatpush2.msra.mxu0 0.0
    %104 = vmatprep.subr.mxu0 0.0
    %105 = vmatpush2.msra.mxu0 0.0
    %106 = vmatprep.subr.mxu0 0.0
    %107 = vmatpush2.msra.mxu0 0.0
    %108 = vmatprep.subr.mxu0 0.0
    %109 = vmatpush2.msra.mxu0 0.0
    %110 = vmatprep.subr.mxu0 0.0
    %111 = vmatpush2.msra.mxu0 0.0
    %112 = vmatprep.subr.mxu0 0.0
    %113 = vmatpush2.msra.mxu0 0.0
    %114 = vmatprep.subr.mxu0 0.0
    %115 = vmatpush2.msra.mxu0 0.0
    %116 = vmatprep.subr.mxu0 0.0
    %117 = vmatpush2.msra.mxu0 0.0
    %118 = vmatprep.subr.mxu0 0.0
    %119 = vmatpush2.msra.mxu0 0.0
    %120 = vmatprep.subr.mxu0 0.0
    %121 = vmatpush2.msra.mxu0 0.0
    %122 = vmatprep.mubr.f32.mxu0 0.0
    %123 = vmatmul.mubr.f32.gmra.mxu0 %v53
    %v124 = vpop.f32.mrf.mxu0
    %v125 = vadd.f32 0.0, %v124
    %v126 = vpop.f32.mrf.mxu0
    %127 = vmatprep.mubr.f32.mxu0 0.0
    %128 = vmatmul.mubr.f32.gmra.mxu0 %v56
    %v129 = vpop.f32.mrf.mxu0
    %v130 = vadd.f32 0.0, %v129
    %v131 = vpop.f32.mrf.mxu0
    %132 = vdwg.mxu0
    %135 = vrot.lane.b32.xlu0 %v125, 112
    %v136 = vpop.permute.xlu0 %135
    %137 = vrot.lane.b32.xlu0 %v130, 112
    %v138 = vpop.permute.xlu0 %137
    %141 = vrot.lane.b32.xlu0 %v125, 96
    %v142 = vpop.permute.xlu0 %141
    %143 = vrot.lane.b32.xlu0 %v130, 96
    %v144 = vpop.permute.xlu0 %143
    %147 = vrot.lane.b32.xlu0 %v125, 80
    %v148 = vpop.permute.xlu0 %147
    %149 = vrot.lane.b32.xlu0 %v130, 80
    %v150 = vpop.permute.xlu0 %149
    %153 = vrot.lane.b32.xlu0 %v125, 64
    %v154 = vpop.permute.xlu0 %153
    %155 = vrot.lane.b32.xlu0 %v130, 64
    %v156 = vpop.permute.xlu0 %155
    %v159 = vmul.f32 %v125, %v125
    %v160 = vmul.f32 %v130, %v130
    %v161 = vmul.f32 %v136, %v136
    %v162 = vmul.f32 %v138, %v138
    %vm163 = vcmask 130048
    %v164 = vsel %vm163, %v159, 0.0
    %165 = vadd.xlane.f32.xlu0 %v164
    %v166 = vpop.xlane.xlu0 %165
    %v167 = vsel %vm163, %v160, 0.0
    %168 = vadd.xlane.f32.xlu0 %v167
    %v169 = vpop.xlane.xlu0 %168
    %v170 = vsel %vm163, %v161, 0.0
    %171 = vadd.xlane.f32.xlu0 %v170
    %v172 = vpop.xlane.xlu0 %171
    %v173 = vsel %vm163, %v162, 0.0
    %174 = vadd.xlane.f32.xlu0 %v173
    %v175 = vpop.xlane.xlu0 %174
    %v176 = vmax.f32 %v166, 1e-08
    %v177 = vmax.f32 %v169, 1e-08
    %v178 = vmax.f32 %v172, 1e-08
    %v179 = vmax.f32 %v175, 1e-08
    %v180 = vrsqrt.pop %v176
    %v181 = vrsqrt.pop %v177
    %v182 = vrsqrt.pop %v178
    %v183 = vrsqrt.pop %v179
    %v184 = vmul.f32 %v125, %v180
    %v185 = vmul.f32 %v130, %v181
    %v186 = vmul.f32 %v136, %v182
    %v187 = vmul.f32 %v138, %v183
    %v188 = vmul.f32 %v46, %v46
    %v189 = vmul.f32 %v142, %v142
    %v190 = vmul.f32 %v144, %v144
    %v191 = vmul.f32 %v148, %v148
    %v192 = vmul.f32 %v150, %v150
    %v193 = vsel %vm163, %v188, 0.0
    %194 = vadd.xlane.f32.xlu0 %v193
    %v195 = vpop.xlane.xlu0 %194
    %v196 = vsel %vm163, %v189, 0.0
    %197 = vadd.xlane.f32.xlu0 %v196
    %v198 = vpop.xlane.xlu0 %197
    %v199 = vsel %vm163, %v190, 0.0
    %200 = vadd.xlane.f32.xlu0 %v199
    %v201 = vpop.xlane.xlu0 %200
    %v202 = vsel %vm163, %v191, 0.0
    %203 = vadd.xlane.f32.xlu0 %v202
    %v204 = vpop.xlane.xlu0 %203
    %v205 = vsel %vm163, %v192, 0.0
    %206 = vadd.xlane.f32.xlu0 %v205
    %v207 = vpop.xlane.xlu0 %206
    %v208 = vmax.f32 %v195, 1e-08
    %v209 = vmax.f32 %v198, 1e-08
    %v210 = vmax.f32 %v201, 1e-08
    %v211 = vmax.f32 %v204, 1e-08
    %v212 = vmax.f32 %v207, 1e-08
    %v213 = vrsqrt.pop %v208
    %v214 = vrsqrt.pop %v209
    %v215 = vrsqrt.pop %v210
    %v216 = vrsqrt.pop %v211
    %v217 = vrsqrt.pop %v212
    %v218 = vmul.f32 %v213, 4.0
    %v219 = vmul.f32 %v214, 4.0
    %v220 = vmul.f32 %v215, 4.0
    %v221 = vmul.f32 %v216, 4.0
    %v222 = vmul.f32 %v217, 4.0
    %v223 = vmul.f32 %v46, %v218
    %v224 = vmul.f32 %v142, %v219
    %v225 = vmul.f32 %v144, %v220
    %v226 = vmul.f32 %v148, %v221
    %v227 = vmul.f32 %v150, %v222
    %v228 = vmul.f32 %v154, %v154
    %v229 = vmul.f32 %v156, %v156
    %235 = vrot.lane.b32.xlu0 %v188, 112
    %v236 = vpop.permute.xlu0 %235
    %237 = vrot.lane.b32.xlu0 %v191, 112
    %v238 = vpop.permute.xlu0 %237
    %239 = vrot.lane.b32.xlu0 %v192, 112
    %v240 = vpop.permute.xlu0 %239
    %241 = vrot.lane.b32.xlu0 %v228, 112
    %v242 = vpop.permute.xlu0 %241
    %243 = vrot.lane.b32.xlu0 %v229, 112
    %v244 = vpop.permute.xlu0 %243
    %v250 = vsel %vm163, %v236, 0.0
    %251 = vadd.xlane.f32.xlu0 %v250
    %v252 = vpop.xlane.xlu0 %251
    %v253 = vsel %vm163, %v238, 0.0
    %254 = vadd.xlane.f32.xlu0 %v253
    %v255 = vpop.xlane.xlu0 %254
    %v256 = vsel %vm163, %v240, 0.0
    %257 = vadd.xlane.f32.xlu0 %v256
    %v258 = vpop.xlane.xlu0 %257
    %v259 = vsel %vm163, %v242, 0.0
    %260 = vadd.xlane.f32.xlu0 %v259
    %v261 = vpop.xlane.xlu0 %260
    %v262 = vsel %vm163, %v244, 0.0
    %263 = vadd.xlane.f32.xlu0 %v262
    %v264 = vpop.xlane.xlu0 %263
    %v265 = vmax.f32 %v252, 1e-08
    %v266 = vmax.f32 %v255, 1e-08
    %v267 = vmax.f32 %v258, 1e-08
    %v268 = vmax.f32 %v261, 1e-08
    %v269 = vmax.f32 %v264, 1e-08
    %v270 = vrsqrt.pop %v265
    %v271 = vrsqrt.pop %v266
    %v272 = vrsqrt.pop %v267
    %v273 = vrsqrt.pop %v268
    %v274 = vrsqrt.pop %v269
    %v275 = vmul.f32 %v270, 4.0
    %v276 = vmul.f32 %v271, 4.0
    %v277 = vmul.f32 %v272, 4.0
    %v278 = vmul.f32 %v273, 4.0
    %v279 = vmul.f32 %v274, 4.0
    %v280 = vmul.f32 %v46, %v275
    %v281 = vmul.f32 %v148, %v276
    %v282 = vmul.f32 %v150, %v277
    %v283 = vmul.f32 %v154, %v278
    %v284 = vmul.f32 %v156, %v279
    %v286 = vsel %vm163, %v184, 0
    %v289 = vsel %vm163, %v185, 0
    %v292 = vsel %vm163, %v186, 0
    %v295 = vsel %vm163, %v187, 0
    %v298 = vsel %vm163, %v223, 0
    %v301 = vsel %vm163, %v224, 0
    %v304 = vsel %vm163, %v225, 0
    %v307 = vsel %vm163, %v226, 0
    %v310 = vsel %vm163, %v227, 0
    %312 = vmatprep.subr.mxu0 0.0
    %313 = vmatpush1.xpose.msra.mxu0 0.0
    %314 = vmatprep.subr.mxu0 0.0
    %315 = vmatpush1.xpose.msra.mxu0 0.0
    %316 = vmatprep.subr.mxu0 0.0
    %317 = vmatpush1.xpose.msra.mxu0 0.0
    %318 = vmatprep.subr.mxu0 0.0
    %319 = vmatpush1.xpose.msra.mxu0 0.0
    %320 = vmatprep.subr.mxu0 0.0
    %321 = vmatpush1.xpose.msra.mxu0 0.0
    %322 = vmatprep.subr.mxu0 0.0
    %323 = vmatpush1.xpose.msra.mxu0 0.0
    %324 = vmatprep.subr.mxu0 0.0
    %325 = vmatpush1.xpose.msra.mxu0 0.0
    %326 = vmatprep.subr.mxu0 0.0
    %327 = vmatpush1.xpose.msra.mxu0 0.0
    %328 = vmatprep.subr.mxu0 0.0
    %329 = vmatpush1.xpose.msra.mxu0 0.0
    %330 = vmatprep.subr.mxu0 0.0
    %331 = vmatpush1.xpose.msra.mxu0 0.0
    %332 = vmatprep.subr.mxu0 0.0
    %333 = vmatpush1.xpose.msra.mxu0 0.0
    %334 = vmatprep.subr.mxu0 0.0
    %335 = vmatpush1.xpose.msra.mxu0 %v310
    %336 = vmatprep.subr.mxu0 0.0
    %337 = vmatpush1.xpose.msra.mxu0 %v307
    %338 = vmatprep.subr.mxu0 0.0
    %339 = vmatpush1.xpose.msra.mxu0 %v304
    %340 = vmatprep.subr.mxu0 0.0
    %341 = vmatpush1.xpose.msra.mxu0 %v301
    %342 = vmatprep.subr.mxu0 0.0
    %343 = vmatpush1.xpose.msra.mxu0 %v298
    %344 = vmatprep.subr.mxu0 0.0
    %345 = vmatpush2.xpose.msra.mxu0 0.0
    %346 = vmatprep.subr.mxu0 0.0
    %347 = vmatpush2.xpose.msra.mxu0 0.0
    %348 = vmatprep.subr.mxu0 0.0
    %349 = vmatpush2.xpose.msra.mxu0 0.0
    %350 = vmatprep.subr.mxu0 0.0
    %351 = vmatpush2.xpose.msra.mxu0 0.0
    %352 = vmatprep.subr.mxu0 0.0
    %353 = vmatpush2.xpose.msra.mxu0 0.0
    %354 = vmatprep.subr.mxu0 0.0
    %355 = vmatpush2.xpose.msra.mxu0 0.0
    %356 = vmatprep.subr.mxu0 0.0
    %357 = vmatpush2.xpose.msra.mxu0 0.0
    %358 = vmatprep.subr.mxu0 0.0
    %359 = vmatpush2.xpose.msra.mxu0 0.0
    %360 = vmatprep.subr.mxu0 0.0
    %361 = vmatpush2.xpose.msra.mxu0 0.0
    %362 = vmatprep.subr.mxu0 0.0
    %363 = vmatpush2.xpose.msra.mxu0 0.0
    %364 = vmatprep.subr.mxu0 0.0
    %365 = vmatpush2.xpose.msra.mxu0 0.0
    %366 = vmatprep.subr.mxu0 0.0
    %367 = vmatpush2.xpose.msra.mxu0 0.0
    %368 = vmatprep.subr.mxu0 0.0
    %369 = vmatpush2.xpose.msra.mxu0 0.0
    %370 = vmatprep.subr.mxu0 0.0
    %371 = vmatpush2.xpose.msra.mxu0 0.0
    %372 = vmatprep.subr.mxu0 0.0
    %373 = vmatpush2.xpose.msra.mxu0 0.0
    %374 = vmatprep.subr.mxu0 0.0
    %375 = vmatpush2.xpose.msra.mxu0 0.0
    %376 = vmatprep.mubr.f32.mxu0 0.0
    %377 = vmatmul.mubr.f32.gmra.mxu0 %v286
    %v378 = vpop.f32.mrf.mxu0
    %v379 = vadd.f32 %v47, %v378
    %v380 = vpop.f32.mrf.mxu0
    %381 = vmatprep.mubr.f32.mxu0 0.0
    %382 = vmatmul.mubr.f32.gmra.mxu0 %v289
    %v383 = vpop.f32.mrf.mxu0
    %v384 = vadd.f32 %v48, %v383
    %v385 = vpop.f32.mrf.mxu0
    %386 = vmatprep.mubr.f32.mxu0 0.0
    %387 = vmatmul.mubr.f32.gmra.mxu0 %v292
    %v388 = vpop.f32.mrf.mxu0
    %v389 = vadd.f32 %v49, %v388
    %v390 = vpop.f32.mrf.mxu0
    %391 = vmatprep.mubr.f32.mxu0 0.0
    %392 = vmatmul.mubr.f32.gmra.mxu0 %v295
    %v393 = vpop.f32.mrf.mxu0
    %v394 = vadd.f32 %v50, %v393
    %v395 = vpop.f32.mrf.mxu0
    %396 = vdwg.mxu0
    %vm397 = vcmask 326656
    %v398 = vsel %vm397, %v379, -inf
    %399 = vmax.xlane.f32.xlu0 %v398
    %v400 = vpop.xlane.xlu0 %399
    %v401 = vsel %vm397, %v384, -inf
    %402 = vmax.xlane.f32.xlu0 %v401
    %v403 = vpop.xlane.xlu0 %402
    %v404 = vsel %vm397, %v389, -inf
    %405 = vmax.xlane.f32.xlu0 %v404
    %v406 = vpop.xlane.xlu0 %405
    %v407 = vsel %vm397, %v394, -inf
    %408 = vmax.xlane.f32.xlu0 %v407
    %v409 = vpop.xlane.xlu0 %408
    %v410 = vsub.f32 %v379, %v400
    %v411 = vsub.f32 %v384, %v403
    %v412 = vsub.f32 %v389, %v406
    %v413 = vsub.f32 %v394, %v409
    %v414 = vmul.f32 %v410, 1.442695
    %v415 = vpow.pop %v414
    %v416 = vmul.f32 %v411, 1.442695
    %v417 = vpow.pop %v416
    %v418 = vmul.f32 %v412, 1.442695
    %v419 = vpow.pop %v418
    %v420 = vmul.f32 %v413, 1.442695
    %v421 = vpow.pop %v420
    %v422 = vsel %vm397, %v415, 0.0
    %423 = vadd.xlane.f32.xlu0 %v422
    %v424 = vpop.xlane.xlu0 %423
    %v425 = vsel %vm397, %v417, 0.0
    %426 = vadd.xlane.f32.xlu0 %v425
    %v427 = vpop.xlane.xlu0 %426
    %v428 = vsel %vm397, %v419, 0.0
    %429 = vadd.xlane.f32.xlu0 %v428
    %v430 = vpop.xlane.xlu0 %429
    %v431 = vsel %vm397, %v421, 0.0
    %432 = vadd.xlane.f32.xlu0 %v431
    %v433 = vpop.xlane.xlu0 %432
    %v434 = vrcp.pop %v424
    %v435 = vrcp.pop %v427
    %v436 = vrcp.pop %v430
    %v437 = vrcp.pop %v433
    %443 = vrot.lane.b32.xlu0 %v280, 112
    %v444 = vpop.permute.xlu0 %443
    %445 = vrot.lane.b32.xlu0 %v281, 112
    %v446 = vpop.permute.xlu0 %445
    %447 = vrot.lane.b32.xlu0 %v282, 112
    %v448 = vpop.permute.xlu0 %447
    %449 = vrot.lane.b32.xlu0 %v283, 112
    %v450 = vpop.permute.xlu0 %449
    %451 = vrot.lane.b32.xlu0 %v284, 112
    %v452 = vpop.permute.xlu0 %451
    %v459 = vsel %vm397, %v415, 0
    %v462 = vsel %vm397, %v417, 0
    %v465 = vsel %vm397, %v419, 0
    %v468 = vsel %vm397, %v421, 0
    %470 = vmatprep.subr.mxu0 0.0
    %471 = vmatpush1.msra.mxu0 0.0
    %472 = vmatprep.subr.mxu0 0.0
    %473 = vmatpush1.msra.mxu0 0.0
    %474 = vmatprep.subr.mxu0 0.0
    %475 = vmatpush1.msra.mxu0 0.0
    %476 = vmatprep.subr.mxu0 0.0
    %477 = vmatpush1.msra.mxu0 0.0
    %478 = vmatprep.subr.mxu0 0.0
    %479 = vmatpush1.msra.mxu0 0.0
    %480 = vmatprep.subr.mxu0 0.0
    %481 = vmatpush1.msra.mxu0 0.0
    %482 = vmatprep.subr.mxu0 0.0
    %483 = vmatpush1.msra.mxu0 0.0
    %484 = vmatprep.subr.mxu0 0.0
    %485 = vmatpush1.msra.mxu0 0.0
    %486 = vmatprep.subr.mxu0 0.0
    %487 = vmatpush1.msra.mxu0 0.0
    %488 = vmatprep.subr.mxu0 0.0
    %489 = vmatpush1.msra.mxu0 0.0
    %490 = vmatprep.subr.mxu0 0.0
    %491 = vmatpush1.msra.mxu0 0.0
    %492 = vmatprep.subr.mxu0 0.0
    %493 = vmatpush1.msra.mxu0 %v452
    %494 = vmatprep.subr.mxu0 0.0
    %495 = vmatpush1.msra.mxu0 %v450
    %496 = vmatprep.subr.mxu0 0.0
    %497 = vmatpush1.msra.mxu0 %v448
    %498 = vmatprep.subr.mxu0 0.0
    %499 = vmatpush1.msra.mxu0 %v446
    %500 = vmatprep.subr.mxu0 0.0
    %501 = vmatpush1.msra.mxu0 %v444
    %502 = vmatprep.subr.mxu0 0.0
    %503 = vmatpush2.msra.mxu0 0.0
    %504 = vmatprep.subr.mxu0 0.0
    %505 = vmatpush2.msra.mxu0 0.0
    %506 = vmatprep.subr.mxu0 0.0
    %507 = vmatpush2.msra.mxu0 0.0
    %508 = vmatprep.subr.mxu0 0.0
    %509 = vmatpush2.msra.mxu0 0.0
    %510 = vmatprep.subr.mxu0 0.0
    %511 = vmatpush2.msra.mxu0 0.0
    %512 = vmatprep.subr.mxu0 0.0
    %513 = vmatpush2.msra.mxu0 0.0
    %514 = vmatprep.subr.mxu0 0.0
    %515 = vmatpush2.msra.mxu0 0.0
    %516 = vmatprep.subr.mxu0 0.0
    %517 = vmatpush2.msra.mxu0 0.0
    %518 = vmatprep.subr.mxu0 0.0
    %519 = vmatpush2.msra.mxu0 0.0
    %520 = vmatprep.subr.mxu0 0.0
    %521 = vmatpush2.msra.mxu0 0.0
    %522 = vmatprep.subr.mxu0 0.0
    %523 = vmatpush2.msra.mxu0 0.0
    %524 = vmatprep.subr.mxu0 0.0
    %525 = vmatpush2.msra.mxu0 0.0
    %526 = vmatprep.subr.mxu0 0.0
    %527 = vmatpush2.msra.mxu0 0.0
    %528 = vmatprep.subr.mxu0 0.0
    %529 = vmatpush2.msra.mxu0 0.0
    %530 = vmatprep.subr.mxu0 0.0
    %531 = vmatpush2.msra.mxu0 0.0
    %532 = vmatprep.subr.mxu0 0.0
    %533 = vmatpush2.msra.mxu0 0.0
    %534 = vmatprep.mubr.f32.mxu0 0.0
    %535 = vmatmul.mubr.f32.gmra.mxu0 %v459
    %v536 = vpop.f32.mrf.mxu0
    %v537 = vadd.f32 0.0, %v536
    %v538 = vpop.f32.mrf.mxu0
    %539 = vmatprep.mubr.f32.mxu0 0.0
    %540 = vmatmul.mubr.f32.gmra.mxu0 %v462
    %v541 = vpop.f32.mrf.mxu0
    %v542 = vadd.f32 0.0, %v541
    %v543 = vpop.f32.mrf.mxu0
    %544 = vmatprep.mubr.f32.mxu0 0.0
    %545 = vmatmul.mubr.f32.gmra.mxu0 %v465
    %v546 = vpop.f32.mrf.mxu0
    %v547 = vadd.f32 0.0, %v546
    %v548 = vpop.f32.mrf.mxu0
    %549 = vmatprep.mubr.f32.mxu0 0.0
    %550 = vmatmul.mubr.f32.gmra.mxu0 %v468
    %v551 = vpop.f32.mrf.mxu0
    %v552 = vadd.f32 0.0, %v551
    %v553 = vpop.f32.mrf.mxu0
    %554 = vdwg.mxu0
    %v555 = vmul.f32 %v537, %v434
    %v556 = vmul.f32 %v542, %v435
    %v557 = vmul.f32 %v547, %v436
    %v558 = vmul.f32 %v552, %v437
    %561 = vrot.lane.b32.xlu0 %v557, 16
    %v562 = vpop.permute.xlu0 %561
    %563 = vrot.lane.b32.xlu0 %v558, 16
    %v564 = vpop.permute.xlu0 %563
    %v567 = vsel %vm163, %v555, %v562
    %v568 = vsel %vm163, %v556, %v564
    %573 = vrot.lane.b32.xlu0 %v42, 32
    %v574 = vpop.permute.xlu0 %573
    %575 = vrot.lane.b32.xlu0 %v43, 32
    %v576 = vpop.permute.xlu0 %575
    %577 = vrot.lane.b32.xlu0 %v44, 32
    %v578 = vpop.permute.xlu0 %577
    %579 = vrot.lane.b32.xlu0 %v45, 32
    %v580 = vpop.permute.xlu0 %579
    %v586 = vsel %vm51, %v567, 0
    %v589 = vsel %vm51, %v568, 0
    %591 = vmatprep.subr.mxu0 0.0
    %592 = vmatpush1.msra.mxu0 0.0
    %593 = vmatprep.subr.mxu0 0.0
    %594 = vmatpush1.msra.mxu0 0.0
    %595 = vmatprep.subr.mxu0 0.0
    %596 = vmatpush1.msra.mxu0 0.0
    %597 = vmatprep.subr.mxu0 0.0
    %598 = vmatpush1.msra.mxu0 0.0
    %599 = vmatprep.subr.mxu0 0.0
    %600 = vmatpush1.msra.mxu0 0.0
    %601 = vmatprep.subr.mxu0 0.0
    %602 = vmatpush1.msra.mxu0 0.0
    %603 = vmatprep.subr.mxu0 0.0
    %604 = vmatpush1.msra.mxu0 0.0
    %605 = vmatprep.subr.mxu0 0.0
    %606 = vmatpush1.msra.mxu0 0.0
    %607 = vmatprep.subr.mxu0 0.0
    %608 = vmatpush1.msra.mxu0 0.0
    %609 = vmatprep.subr.mxu0 0.0
    %610 = vmatpush1.msra.mxu0 0.0
    %611 = vmatprep.subr.mxu0 0.0
    %612 = vmatpush1.msra.mxu0 0.0
    %613 = vmatprep.subr.mxu0 0.0
    %614 = vmatpush1.msra.mxu0 0.0
    %615 = vmatprep.subr.mxu0 0.0
    %616 = vmatpush1.msra.mxu0 %v580
    %617 = vmatprep.subr.mxu0 0.0
    %618 = vmatpush1.msra.mxu0 %v578
    %619 = vmatprep.subr.mxu0 0.0
    %620 = vmatpush1.msra.mxu0 %v576
    %621 = vmatprep.subr.mxu0 0.0
    %622 = vmatpush1.msra.mxu0 %v574
    %623 = vmatprep.subr.mxu0 0.0
    %624 = vmatpush2.msra.mxu0 0.0
    %625 = vmatprep.subr.mxu0 0.0
    %626 = vmatpush2.msra.mxu0 0.0
    %627 = vmatprep.subr.mxu0 0.0
    %628 = vmatpush2.msra.mxu0 0.0
    %629 = vmatprep.subr.mxu0 0.0
    %630 = vmatpush2.msra.mxu0 0.0
    %631 = vmatprep.subr.mxu0 0.0
    %632 = vmatpush2.msra.mxu0 0.0
    %633 = vmatprep.subr.mxu0 0.0
    %634 = vmatpush2.msra.mxu0 0.0
    %635 = vmatprep.subr.mxu0 0.0
    %636 = vmatpush2.msra.mxu0 0.0
    %637 = vmatprep.subr.mxu0 0.0
    %638 = vmatpush2.msra.mxu0 0.0
    %639 = vmatprep.subr.mxu0 0.0
    %640 = vmatpush2.msra.mxu0 0.0
    %641 = vmatprep.subr.mxu0 0.0
    %642 = vmatpush2.msra.mxu0 0.0
    %643 = vmatprep.subr.mxu0 0.0
    %644 = vmatpush2.msra.mxu0 0.0
    %645 = vmatprep.subr.mxu0 0.0
    %646 = vmatpush2.msra.mxu0 0.0
    %647 = vmatprep.subr.mxu0 0.0
    %648 = vmatpush2.msra.mxu0 0.0
    %649 = vmatprep.subr.mxu0 0.0
    %650 = vmatpush2.msra.mxu0 0.0
    %651 = vmatprep.subr.mxu0 0.0
    %652 = vmatpush2.msra.mxu0 0.0
    %653 = vmatprep.subr.mxu0 0.0
    %654 = vmatpush2.msra.mxu0 0.0
    %655 = vmatprep.mubr.f32.mxu0 0.0
    %656 = vmatmul.mubr.f32.gmra.mxu0 %v586
    %v657 = vpop.f32.mrf.mxu0
    %v658 = vadd.f32 0.0, %v657
    %v659 = vpop.f32.mrf.mxu0
    %660 = vmatprep.mubr.f32.mxu0 0.0
    %661 = vmatmul.mubr.f32.gmra.mxu0 %v589
    %v662 = vpop.f32.mrf.mxu0
    %v663 = vadd.f32 0.0, %v662
    %v664 = vpop.f32.mrf.mxu0
    %665 = vdwg.mxu0
    %v666 = vmul.f32 %v658, 0.7
    %v667 = vmul.f32 %v663, 0.7
    %v668 = vmul.f32 %v40, 0.3
    %v669 = vmul.f32 %v41, 0.3
    %v670 = vadd.f32 %v666, %v668
    %v671 = vadd.f32 %v667, %v669
    %v672 = vmul.f32 %v670, 1.3130643
    %v673 = vmul.f32 %v671, 1.3130643
    %674 = vst.msk [vmem:[#allocation7] sm:$0xff] %vm51, %v672
    %675 = vst.msk [vmem:[#allocation7 + $0x8] sm:$0xff] %vm51, %v673
    // Predicated region
    $region18: #{tpu_custom_call.1} parent=1 // pred_check
      _
    $region19: #{tpu_custom_call.1} parent=1 // pred_check_branch
      %677 = sbr.rel (0) target = $region21
    $region20: #{tpu_custom_call.1} parent=1 // pred_region
      %s679 = ssub.s32 256, 256
      %680 = vsyncadd [#allocation4], %s679
      %s681 = sshll.u32 [#allocation7], 4
      %s682 = int_to_ptr.vmem [resolvable:$true] %s681
      %687 = dma.vmem_to_hbm [thread:$0]  %s682, 256, %s2, [#allocation4], 128, 128, 8
    $region21: #{tpu_custom_call.1} parent=1 // pred_fallthru
      _
    // Predicated region
    $region22: #{tpu_custom_call.1} parent=1 // pred_check
      _
    $region23: #{tpu_custom_call.1} parent=1 // pred_check_branch
      %689 = sbr.rel (0) target = $region25
    $region24: #{tpu_custom_call.1} parent=1 // pred_region
      %690 = dma.done [#allocation4], 256
    $region25: #{tpu_custom_call.1} parent=1 // pred_fallthru
      _
    %691 = vsyncpa [#allocation3], 1
    %692 = vsyncpa [#allocation6], 1
    %693 = vsyncpa [#allocation4], 1

</llo_original>
